<compile_context>
chip_gen: v7x
topology: tpu7x:2x2x1
jax: 0.10.0
libtpu: 0.0.40
codegen_flags: <defaults>
</compile_context>

<pallas_src>
import jax
import jax.numpy as jnp
from jax.experimental import pallas as pl
from jax.experimental.pallas import tpu as pltpu


def cls_head_kernel(x_ref, w_ref, b_ref, o_ref):
    # x_ref: [TB, D]   w_ref: [D, N]   b_ref: [1, N]   o_ref: [TB, N]
    y = jnp.dot(x_ref[...], w_ref[...], preferred_element_type=jnp.float32)
    o_ref[...] = (y + b_ref[...]).astype(o_ref.dtype)


def classification_head(x, w, b, *, block_rows=1024, min_pallas_rows=512,
                        force_pallas=False):
    """x: [B, S, D]; w: [D, N] (nn.Linear weight pre-transposed); b: [N]."""
    B, S, D = x.shape
    N = w.shape[1]

    # Small-batch fallback: the kernel is pure fixed cost below a few hundred
    # rows; a fused XLA dot is as fast or faster.
    if not force_pallas and B < min_pallas_rows:
        return x[:, 0, :] @ w + b

    x0 = x[:, 0, :]                     # fused into the pallas input DMA below
    b2 = b.reshape(1, N)

    tb = min(block_rows, B)             # row tile (full B for small B)
    grid = (pl.cdiv(B, tb),)

    flops = 2 * B * D * N
    bytes_accessed = 4 * (B * D + D * N + N + B * N)

    out = pl.pallas_call(
        cls_head_kernel,
        out_shape=jax.ShapeDtypeStruct((B, N), x.dtype),
        grid_spec=pltpu.PrefetchScalarGridSpec(
            num_scalar_prefetch=0,
            grid=grid,
            in_specs=[
                pl.BlockSpec((tb, D), lambda i: (i, 0)),   # stream CLS-row tiles
                pl.BlockSpec((D, N), lambda i: (0, 0)),    # weight VMEM-resident
                pl.BlockSpec((1, N), lambda i: (0, 0)),    # bias VMEM-resident
            ],
            out_specs=pl.BlockSpec((tb, N), lambda i: (i, 0)),
        ),
        compiler_params=pltpu.CompilerParams(
            dimension_semantics=("parallel",),
            # Fuse the x[:, 0, :] slice into operand 0's DMA (no HBM round-trip).
            allow_input_fusion=[True, False, False],
        ),
        cost_estimate=pl.CostEstimate(
            flops=flops, transcendentals=0, bytes_accessed=bytes_accessed),
    )(x0, w, b2)

    return out


if __name__ == "__main__":
    # Shapes consistent with the module defaults: d_model=300, output_dim=5.
    batch, seq, d_model, output_dim = 2, 8, 300, 5

    key = jax.random.PRNGKey(0)
    kx, kw, kb = jax.random.split(key, 3)

    x = jax.random.normal(kx, (batch, seq, d_model), dtype=jnp.float32)
    # Mirror the PyTorch init: normal_(weight, std=0.02); normal_(bias, 0).
    w_pt = 0.02 * jax.random.normal(kw, (output_dim, d_model), dtype=jnp.float32)
    b = jax.random.normal(kb, (output_dim,), dtype=jnp.float32)

    w = w_pt.T                                   # [d_model, output_dim]

    # jit so the CLS slice can actually fuse into the pallas input DMA;
    # force_pallas ensures the kernel path is exercised at this tiny batch.
    head = jax.jit(lambda x, w, b: classification_head(x, w, b, force_pallas=True))
    out = head(x, w, b)
    jax.block_until_ready(out)

    # Reference check in plain JAX.
    ref = x[:, 0, :] @ w + b
    assert out.shape == (batch, output_dim)
    assert jnp.allclose(out, ref, atol=1e-4, rtol=1e-4)

    print("KERNEL_OK")
</pallas_src>

<mosaic_0001>
module attributes {stable_mosaic.version = 11 : i64} {
  func.func @cls_head_kernel(%arg0: i32, %arg1: memref<2x300xf32, #tpu.memory_space<vmem>>, %arg2: memref<300x5xf32, #tpu.memory_space<vmem>>, %arg3: memref<1x5xf32, #tpu.memory_space<vmem>>, %arg4: memref<2x5xf32, #tpu.memory_space<vmem>>) attributes {dimension_semantics = [#tpu.dimension_semantics<parallel>], iteration_bounds = array<i64: 1>, scalar_prefetch = 0 : i64, scratch_operands = 0 : i64, tpu.core_type = #tpu.core_type<tc>, window_params = [{transform_indices = @transform_0, window_bounds = array<i64: 2, 300>}, {pipeline_mode = #tpu.pipeline_mode<synchronous>, transform_indices = @transform_1, window_bounds = array<i64: 300, 5>}, {pipeline_mode = #tpu.pipeline_mode<synchronous>, transform_indices = @transform_2, window_bounds = array<i64: 1, 5>}, {transform_indices = @transform_3, window_bounds = array<i64: 2, 5>}]} {
    %c0 = arith.constant 0 : index
    %c0_0 = arith.constant 0 : index
    %0 = vector.load %arg1[%c0, %c0_0] : memref<2x300xf32, #tpu.memory_space<vmem>>, vector<2x300xf32>
    %c0_1 = arith.constant 0 : index
    %c0_2 = arith.constant 0 : index
    %1 = vector.load %arg2[%c0_1, %c0_2] : memref<300x5xf32, #tpu.memory_space<vmem>>, vector<300x5xf32>
    %cst = arith.constant dense<0.000000e+00> : vector<2x5xf32>
    %2 = tpu.matmul %0, %1, %cst {dimension_numbers = #tpu.dot_dimension_numbers<[1], [0], [0], [1], [0, 0, 1, 1], [], []>} : vector<2x300xf32>, vector<300x5xf32>, vector<2x5xf32> -> vector<2x5xf32>
    %c0_3 = arith.constant 0 : index
    %c0_4 = arith.constant 0 : index
    %3 = vector.load %arg3[%c0_3, %c0_4] : memref<1x5xf32, #tpu.memory_space<vmem>>, vector<1x5xf32>
    %4 = vector.broadcast %3 : vector<1x5xf32> to vector<2x5xf32>
    %5 = arith.addf %2, %4 : vector<2x5xf32>
    %c0_5 = arith.constant 0 : index
    %c0_6 = arith.constant 0 : index
    %6 = vector.load %arg4[%c0_5, %c0_6] : memref<2x5xf32, #tpu.memory_space<vmem>>, vector<2x5xf32>
    tpu.vector_store %arg4[%c0_5, %c0_6], %5 {strides = array<i32>} : memref<2x5xf32, #tpu.memory_space<vmem>>, vector<2x5xf32>,
    return
  }
  func.func @transform_0(%arg0: i32) -> (i32, i32) {
    %c0_i32 = arith.constant 0 : i32
    %c0_i32_0 = arith.constant 0 : i32
    return %arg0, %c0_i32 : i32, i32
  }
  func.func @transform_1(%arg0: i32) -> (i32, i32) {
    %c0_i32 = arith.constant 0 : i32
    %c0_i32_0 = arith.constant 0 : i32
    %c0_i32_1 = arith.constant 0 : i32
    return %c0_i32, %c0_i32_0 : i32, i32
  }
  func.func @transform_2(%arg0: i32) -> (i32, i32) {
    %c0_i32 = arith.constant 0 : i32
    %c0_i32_0 = arith.constant 0 : i32
    %c0_i32_1 = arith.constant 0 : i32
    return %c0_i32, %c0_i32_0 : i32, i32
  }
  func.func @transform_3(%arg0: i32) -> (i32, i32) {
    %c0_i32 = arith.constant 0 : i32
    %c0_i32_0 = arith.constant 0 : i32
    return %arg0, %c0_i32 : i32, i32
  }
}

</mosaic_0001>

<llo_original>
// kernel: _lambda_.2
$region0: #{_lambda_.2}
  #allocation0 [shape = 'u32[]', space=smem, size = 0x4, offset = 0x4, fixed_abs, tag = 'smem constant byte address 0x4 - core index']
  #allocation1 [shape = 'u32[144,128]{1,0:T(1,128)}', space=vmem, size = 0x12000, scoped, tag = 'internal scratch']
  %s0 = inlined_call_operand.vmem [shape: f32[300,5], index: 0, kind: input, shape index: {}]
  %s1 = inlined_call_operand.vmem [shape: f32[1,5], index: 1, kind: input, shape index: {}]
  %s2 = inlined_call_operand.vmem [shape: f32[2,1,300], index: 2, kind: input, shape index: {}]
  %s3 = inlined_call_operand.hbm [shape: f32[2,5], index: 3, kind: output, shape index: {}]
  %s4 = sld [smem:[#allocation0]]
  $region22: #{_lambda_.2} parent=0
    _
  %s6 = ssub.s32 1, %s4
  %s7 = scalar_select 0, %s6, %s4
  $region1: #{_lambda_.2} parent=0
    #allocation2 [shape = 'u8[1024]{0}', space=vmem, size = 0x400, scoped, tag = 'output window, operand 0, single buffered']
    #allocation3 [shape = 's32[1]{0}', space=sflag, size = 0x4, scoped, tag = 'scoped memory for _lambda_.2']
    #allocation4 [shape = 'u8[3072]{0}', space=vmem, size = 0xc00, dematerialized = true, scoped, tag = 'FusionAdapter Buffer %copy_bitcast_fusion.1 = f32[2,300]{1,0:T(2,128)} fusion(%param_2.1), kind=kLoop, calls=%fused_computation.clone.clone, metadata={op_name="jit(<lambda>)/squeeze" stack_frame_id=8}']
    %8 = vsyncpa [#allocation3], 0
    // Predicated region
    $region2: #{_lambda_.2} parent=1 // pred_check
      _
    $region3: #{_lambda_.2} parent=1 // pred_check_branch
      %10 = sbr.rel (0) target = $region5
    $region4: #{_lambda_.2} parent=1 // pred_region
      _
    $region5: #{_lambda_.2} parent=1 // pred_fallthru
      _
    // Predicated region
    $region6: #{_lambda_.2} parent=1 // pred_check
      _
    $region7: #{_lambda_.2} parent=1 // pred_check_branch
      %12 = sbr.rel (0) target = $region9
    $region8: #{_lambda_.2} parent=1 // pred_region
      _
    $region9: #{_lambda_.2} parent=1 // pred_fallthru
      _
    // Predicated region
    $region10: #{_lambda_.2} parent=1 // pred_check
      _
    $region11: #{_lambda_.2} parent=1 // pred_check_branch
      %14 = sbr.rel (0) target = $region13
    $region12: #{_lambda_.2} parent=1 // pred_region
      _
    $region13: #{_lambda_.2} parent=1 // pred_fallthru
      _
    %s16 = sand.u32 255, 3
    %s17 = sand.u32 %s16, 3
    %v18 = vld [vmem:[%s2] ss:$3 sm:%s17]
    %20 = vst [vmem:[#allocation4] sm:$0x3] %v18
    %s21 = scalar_lea.vmem %s2, 1
    %s23 = sand.u32 255, 3
    %s24 = sand.u32 %s23, 3
    %v25 = vld [vmem:[%s21] ss:$3 sm:%s24]
    %s26 = scalar_lea.vmem [#allocation4], 2
    %28 = vst [vmem:[%s26] sm:$0x3] %v25
    %s29 = scalar_lea.vmem %s2, 2
    %s31 = sand.u32 255, 3
    %s32 = sand.u32 %s31, 3
    %v33 = vld [vmem:[%s29] ss:$3 sm:%s32]
    %s34 = scalar_lea.vmem [#allocation4], 4
    %36 = vst [vmem:[%s34] sm:$0x3] %v33
    %v37 = vld [vmem:[#allocation4] sm:$0x3f]
    %v38 = vld [vmem:[%s0] sm:$0xff]
    %v39 = vld [vmem:[%s0 + $0x8] sm:$0xff]
    %v40 = vld [vmem:[%s0 + $0x10] sm:$0xff]
    %v41 = vld [vmem:[%s0 + $0x18] sm:$0xff]
    %v42 = vld [vmem:[%s0 + $0x20] sm:$0xff]
    %v43 = vld [vmem:[%s0 + $0x28] sm:$0xff]
    %v44 = vld [vmem:[%s0 + $0x30] sm:$0xff]
    %v45 = vld [vmem:[%s0 + $0x38] sm:$0xff]
    %v46 = vld [vmem:[%s0 + $0x40] sm:$0xff]
    %v47 = vld [vmem:[%s0 + $0x48] sm:$0xff]
    %v48 = vld [vmem:[%s0 + $0x50] sm:$0xff]
    %v49 = vld [vmem:[%s0 + $0x58] sm:$0xff]
    %v50 = vld [vmem:[%s0 + $0x60] sm:$0xff]
    %v51 = vld [vmem:[%s0 + $0x68] sm:$0xff]
    %v52 = vld [vmem:[%s0 + $0x70] sm:$0xff]
    %v53 = vld [vmem:[%s0 + $0x78] sm:$0xff]
    %v54 = vld [vmem:[%s0 + $0x80] sm:$0xff]
    %v55 = vld [vmem:[%s0 + $0x88] sm:$0xff]
    %v56 = vld [vmem:[%s0 + $0x90] sm:$0xff]
    %v57 = vld [vmem:[%s0 + $0x98] sm:$0xff]
    %v58 = vld [vmem:[%s0 + $0xa0] sm:$0xff]
    %v59 = vld [vmem:[%s0 + $0xa8] sm:$0xff]
    %v60 = vld [vmem:[%s0 + $0xb0] sm:$0xff]
    %v61 = vld [vmem:[%s0 + $0xb8] sm:$0xff]
    %v62 = vld [vmem:[%s0 + $0xc0] sm:$0xff]
    %v63 = vld [vmem:[%s0 + $0xc8] sm:$0xff]
    %v64 = vld [vmem:[%s0 + $0xd0] sm:$0xff]
    %v65 = vld [vmem:[%s0 + $0xd8] sm:$0xff]
    %v66 = vld [vmem:[%s0 + $0xe0] sm:$0xff]
    %v67 = vld [vmem:[%s0 + $0xe8] sm:$0xff]
    %v68 = vld [vmem:[%s0 + $0xf0] sm:$0xff]
    %v69 = vld [vmem:[%s0 + $0xf8] sm:$0xff]
    %v70 = vld [vmem:[%s0 + $0x100] sm:$0xff]
    %v71 = vld [vmem:[%s0 + $0x108] sm:$0xff]
    %v72 = vld [vmem:[%s0 + $0x110] sm:$0xff]
    %v73 = vld [vmem:[%s0 + $0x118] sm:$0xff]
    %v74 = vld [vmem:[%s0 + $0x120] sm:$0xff]
    %v75 = vld [vmem:[%s0 + $0x128] sm:$0xf]
    %v76 = vld [vmem:[%s1] sm:$0x1]
    %v78 = vlaneseq
    %v79 = vshrl.u32 %v78, 7
    %v80 = vsub.s32 0, %v79
    %v81 = vrot.slane %v76, %v80
    %v84 = vcombine.high %v37, %v37
    %v86 = vunpack.c.l.s4 1983009808
    %v87 = vunpack.c.0.s8 %v86
    %v88 = vlaneseq
    %v89 = vshrl.u32 %v88, 7
    %v90 = vsub.s32 %v87, %v89
    %v91 = vrot.slane %v37, %v90
    %v93 = vunpack.c.l.s4 1983009808
    %v94 = vunpack.c.0.s8 %v93
    %v95 = vlaneseq
    %v96 = vshrl.u32 %v95, 7
    %v97 = vsub.s32 %v94, %v96
    %v98 = vrot.slane %v84, %v97
    %v99 = vcombine.high %v91, %v91
    %vm102 = vcmask 359424
    %v103 = vsel %vm102, %v98, 0
    %vm105 = vcmask 1043456
    %v107 = vsel %vm105, %v75, 0
    %109 = vmatprep.subr.mxu0 0.0
    %110 = vmatpush1.msra.mxu0 %v38
    %111 = vmatprep.subr.mxu0 0.0
    %112 = vmatpush1.msra.mxu0 %v39
    %113 = vmatprep.subr.mxu0 0.0
    %114 = vmatpush1.msra.mxu0 %v40
    %115 = vmatprep.subr.mxu0 0.0
    %116 = vmatpush1.msra.mxu0 %v41
    %117 = vmatprep.subr.mxu0 0.0
    %118 = vmatpush1.msra.mxu0 %v42
    %119 = vmatprep.subr.mxu0 0.0
    %120 = vmatpush1.msra.mxu0 %v43
    %121 = vmatprep.subr.mxu0 0.0
    %122 = vmatpush1.msra.mxu0 %v44
    %123 = vmatprep.subr.mxu0 0.0
    %124 = vmatpush1.msra.mxu0 %v45
    %125 = vmatprep.subr.mxu0 0.0
    %126 = vmatpush1.msra.mxu0 %v46
    %127 = vmatprep.subr.mxu0 0.0
    %128 = vmatpush1.msra.mxu0 %v47
    %129 = vmatprep.subr.mxu0 0.0
    %130 = vmatpush1.msra.mxu0 %v48
    %131 = vmatprep.subr.mxu0 0.0
    %132 = vmatpush1.msra.mxu0 %v49
    %133 = vmatprep.subr.mxu0 0.0
    %134 = vmatpush1.msra.mxu0 %v50
    %135 = vmatprep.subr.mxu0 0.0
    %136 = vmatpush1.msra.mxu0 %v51
    %137 = vmatprep.subr.mxu0 0.0
    %138 = vmatpush1.msra.mxu0 %v52
    %139 = vmatprep.subr.mxu0 0.0
    %140 = vmatpush1.msra.mxu0 %v53
    %141 = vmatprep.subr.mxu0 0.0
    %142 = vmatpush1.msra.mxu0 %v54
    %143 = vmatprep.subr.mxu0 0.0
    %144 = vmatpush1.msra.mxu0 %v55
    %145 = vmatprep.subr.mxu0 0.0
    %146 = vmatpush1.msra.mxu0 %v56
    %147 = vmatprep.subr.mxu0 0.0
    %148 = vmatpush1.msra.mxu0 %v57
    %149 = vmatprep.subr.mxu0 0.0
    %150 = vmatpush1.msra.mxu0 %v58
    %151 = vmatprep.subr.mxu0 0.0
    %152 = vmatpush1.msra.mxu0 %v59
    %153 = vmatprep.subr.mxu0 0.0
    %154 = vmatpush1.msra.mxu0 %v60
    %155 = vmatprep.subr.mxu0 0.0
    %156 = vmatpush1.msra.mxu0 %v61
    %157 = vmatprep.subr.mxu0 0.0
    %158 = vmatpush1.msra.mxu0 %v62
    %159 = vmatprep.subr.mxu0 0.0
    %160 = vmatpush1.msra.mxu0 %v63
    %161 = vmatprep.subr.mxu0 0.0
    %162 = vmatpush1.msra.mxu0 %v64
    %163 = vmatprep.subr.mxu0 0.0
    %164 = vmatpush1.msra.mxu0 %v65
    %165 = vmatprep.subr.mxu0 0.0
    %166 = vmatpush1.msra.mxu0 %v66
    %167 = vmatprep.subr.mxu0 0.0
    %168 = vmatpush1.msra.mxu0 %v67
    %169 = vmatprep.subr.mxu0 0.0
    %170 = vmatpush1.msra.mxu0 %v68
    %171 = vmatprep.subr.mxu0 0.0
    %172 = vmatpush1.msra.mxu0 %v69
    %173 = vmatprep.mubr.f32.mxu0 %v99
    %174 = vmatmul.mubr.f32.gmra.mrb[0].mxu0 %v91
    %v175 = vpop.f32.mrb[0].mxu0
    %v176 = vadd.f32 %v81, %v175
    %v177 = vpop.f32.mrb[0].mxu0
    %178 = vdwg.mxu0
    %179 = vmatprep.subr.mxu0 0.0
    %180 = vmatpush1.msra.mxu0 %v70
    %181 = vmatprep.subr.mxu0 0.0
    %182 = vmatpush1.msra.mxu0 %v71
    %183 = vmatprep.subr.mxu0 0.0
    %184 = vmatpush1.msra.mxu0 %v72
    %185 = vmatprep.subr.mxu0 0.0
    %186 = vmatpush1.msra.mxu0 %v73
    %187 = vmatprep.subr.mxu0 0.0
    %188 = vmatpush1.msra.mxu0 %v74
    %189 = vmatprep.subr.mxu0 0.0
    %190 = vmatpush1.msra.mxu0 %v107
    %191 = vmatprep.subr.mxu0 0.0
    %192 = vmatpush1.msra.mxu0 0.0
    %193 = vmatprep.subr.mxu0 0.0
    %194 = vmatpush1.msra.mxu0 0.0
    %195 = vmatprep.subr.mxu0 0.0
    %196 = vmatpush1.msra.mxu0 0.0
    %197 = vmatprep.subr.mxu0 0.0
    %198 = vmatpush1.msra.mxu0 0.0
    %199 = vmatprep.subr.mxu0 0.0
    %200 = vmatpush1.msra.mxu0 0.0
    %201 = vmatprep.subr.mxu0 0.0
    %202 = vmatpush1.msra.mxu0 0.0
    %203 = vmatprep.subr.mxu0 0.0
    %204 = vmatpush1.msra.mxu0 0.0
    %205 = vmatprep.subr.mxu0 0.0
    %206 = vmatpush1.msra.mxu0 0.0
    %207 = vmatprep.subr.mxu0 0.0
    %208 = vmatpush1.msra.mxu0 0.0
    %209 = vmatprep.subr.mxu0 0.0
    %210 = vmatpush1.msra.mxu0 0.0
    %211 = vmatprep.subr.mxu0 0.0
    %212 = vmatpush1.msra.mxu0 0.0
    %213 = vmatprep.subr.mxu0 0.0
    %214 = vmatpush1.msra.mxu0 0.0
    %215 = vmatprep.subr.mxu0 0.0
    %216 = vmatpush1.msra.mxu0 0.0
    %217 = vmatprep.subr.mxu0 0.0
    %218 = vmatpush1.msra.mxu0 0.0
    %219 = vmatprep.subr.mxu0 0.0
    %220 = vmatpush1.msra.mxu0 0.0
    %221 = vmatprep.subr.mxu0 0.0
    %222 = vmatpush1.msra.mxu0 0.0
    %223 = vmatprep.subr.mxu0 0.0
    %224 = vmatpush1.msra.mxu0 0.0
    %225 = vmatprep.subr.mxu0 0.0
    %226 = vmatpush1.msra.mxu0 0.0
    %227 = vmatprep.subr.mxu0 0.0
    %228 = vmatpush1.msra.mxu0 0.0
    %229 = vmatprep.subr.mxu0 0.0
    %230 = vmatpush1.msra.mxu0 0.0
    %231 = vmatprep.subr.mxu0 0.0
    %232 = vmatpush1.msra.mxu0 0.0
    %233 = vmatprep.subr.mxu0 0.0
    %234 = vmatpush1.msra.mxu0 0.0
    %235 = vmatprep.subr.mxu0 0.0
    %236 = vmatpush1.msra.mxu0 0.0
    %237 = vmatprep.subr.mxu0 0.0
    %238 = vmatpush1.msra.mxu0 0.0
    %239 = vmatprep.subr.mxu0 0.0
    %240 = vmatpush1.msra.mxu0 0.0
    %241 = vmatprep.subr.mxu0 0.0
    %242 = vmatpush1.msra.mxu0 0.0
    %243 = vmatprep.mubr.f32.mxu0 0.0
    %244 = vmatmul.mubr.f32.gmra.mrb[0].mxu0 %v103
    %v245 = vpop.f32.mrb[0].mxu0
    %v246 = vadd.f32 %v176, %v245
    %v247 = vpop.f32.mrb[0].mxu0
    %248 = vdwg.mxu0
    %vm249 = vcmask 33792
    %250 = vst.msk [vmem:[#allocation2] sm:$0x3] %vm249, %v246
    // Predicated region
    $region14: #{_lambda_.2} parent=1 // pred_check
      _
    $region15: #{_lambda_.2} parent=1 // pred_check_branch
      %252 = sbr.rel (0) target = $region17
    $region16: #{_lambda_.2} parent=1 // pred_region
      %s254 = ssub.s32 32, 32
      %255 = vsyncadd [#allocation3], %s254
      %s257 = sshll.u32 [#allocation2], 4
      %s258 = int_to_ptr.vmem [resolvable:$true] %s257
      %260 = dma.vmem_to_hbm [thread:$0]  %s258, 32, %s3, [#allocation3]
    $region17: #{_lambda_.2} parent=1 // pred_fallthru
      _
    // Predicated region
    $region18: #{_lambda_.2} parent=1 // pred_check
      _
    $region19: #{_lambda_.2} parent=1 // pred_check_branch
      %262 = sbr.rel (0) target = $region21
    $region20: #{_lambda_.2} parent=1 // pred_region
      %263 = dma.done [#allocation3], 32
    $region21: #{_lambda_.2} parent=1 // pred_fallthru
      _
    %264 = vsyncpa [#allocation3], 1

</llo_original>
